<compile_context>
chip_gen: v7x
topology: tpu7x:2x2x1
jax: 0.10.0
libtpu: 0.0.40
codegen_flags: <defaults>
</compile_context>

<pallas_src>
import functools

import jax
import jax.numpy as jnp
from jax.experimental import pallas as pl
from jax.experimental.pallas import tpu as pltpu


def _tversky_kernel(x_ref, t_ref, o_ref, g_acc, *,
                    alpha, beta, smooth, n_valid, tile_n, num_classes,
                    has_remainder):
    i = pl.program_id(0)

    @pl.when(i == 0)
    def _init():
        g_acc[...] = jnp.zeros_like(g_acc)

    x = x_ref[...].astype(jnp.float32)          # (tile_n, C) logits
    t = t_ref[...]                              # (1, tile_n) int32 class ids

    if has_remainder:
        # Static branch: only emitted when N is not a tile multiple.
        # Sanitize the ragged tail (uninitialized VMEM rows/lanes):
        #   * logits -> 0 so exp stays finite (NaN * 0 would poison the Gram),
        #   * targets -> out-of-range class id so their one-hot column is
        #     all-zero and the row gets zero weight in the accumulation.
        base = i * tile_n
        row_valid = (jax.lax.broadcasted_iota(jnp.int32, (tile_n, 1), 0)
                     + base) < n_valid
        x = jnp.where(row_valid, x, 0.0)
        lane_valid = (jax.lax.broadcasted_iota(jnp.int32, (1, tile_n), 1)
                      + base) < n_valid
        t = jnp.where(lane_valid, t, num_classes)

    # Row softmax: exp on the EUP; exact reciprocal keeps the 1e-5 tolerance.
    m = jnp.max(x, axis=1, keepdims=True)
    e = jnp.exp(x - m)
    p = e * pl.reciprocal(jnp.sum(e, axis=1, keepdims=True), approx=False)

    # Transposed one-hot built directly in (C, tile_n) layout (sample index on
    # lanes, class index on sublanes) -> no in-kernel transpose needed.
    cls_iota = jax.lax.broadcasted_iota(jnp.int32, (num_classes, tile_n), 0)
    onehot_t = (cls_iota == t).astype(jnp.float32)

    # Single MXU contraction per tile: G[a, b] += sum_i 1[t_i == a] * p[i, b].
    g_acc[...] += jnp.dot(onehot_t, p, preferred_element_type=jnp.float32)

    @pl.when(i == pl.num_programs(0) - 1)
    def _finalize():
        g = g_acc[...]
        c = num_classes
        eye = (jax.lax.broadcasted_iota(jnp.int32, (c, c), 0) ==
               jax.lax.broadcasted_iota(jnp.int32, (c, c), 1)
               ).astype(jnp.float32)
        tp = jnp.sum(g * eye, axis=0, keepdims=True)         # (1, C)  diag(G)
        psum = jnp.sum(g, axis=0, keepdims=True)              # (1, C)  sum_i p
        rowsum = jnp.sum(g, axis=1, keepdims=True)             # (C, 1)  counts
        # Transpose-free move of the per-class counts onto the lane axis.
        cnt = jnp.sum(eye * rowsum, axis=0, keepdims=True)     # (1, C)
        fp = psum - tp
        fn = cnt - tp
        tversky = (tp + smooth) / (tp + alpha * fp + beta * fn + smooth)
        o_ref[0, 0] = 1.0 - jnp.mean(tversky)


def _choose_tile(n, max_tile_n):
    if n <= max_tile_n:
        # Single full-extent block: exempt from the (8,128) rule, no masking.
        return n
    # Multi-tile: tile_n must be a multiple of 128 so the lane-dense targets
    # block (1, tile_n) satisfies the lane-divisibility rule (and 128 | tile_n
    # also satisfies the sublane-8 rule for the logits block).
    return max(128, (max_tile_n // 128) * 128)


def tversky_loss(inputs, targets, *, alpha=0.7, beta=0.3, smooth=1.0,
                 max_tile_n=8192):
    """inputs: (N, C) logits (any float dtype); targets: (N,) int class ids."""
    n, c = inputs.shape
    tile_n = _choose_tile(n, max_tile_n)
    grid = pl.cdiv(n, tile_n)
    has_remainder = (n % tile_n) != 0

    # Lane-dense targets: tiny reshape only; the big (N, C) logits are passed
    # through untouched (no wrapper pad, no wrapper dtype upcast).
    t = targets.astype(jnp.int32).reshape(1, n)

    kernel = functools.partial(
        _tversky_kernel,
        alpha=float(alpha), beta=float(beta), smooth=float(smooth),
        n_valid=n, tile_n=tile_n, num_classes=c,
        has_remainder=has_remainder)

    out = pl.pallas_call(
        kernel,
        out_shape=jax.ShapeDtypeStruct((1, 1), jnp.float32),
        grid=(grid,),
        in_specs=[
            pl.BlockSpec((tile_n, c), lambda i: (i, 0)),   # logits (native dtype)
            pl.BlockSpec((1, tile_n), lambda i: (0, i)),   # targets, lane-dense
        ],
        # Scalar loss lives in SMEM: avoids a lane-sparse (8,128)-padded VMEM
        # store + writeback DMA for a (1,1) result.
        out_specs=pl.BlockSpec(memory_space=pltpu.MemorySpace.SMEM),
        scratch_shapes=[pltpu.VMEM((c, c), jnp.float32)],   # Gram accumulator
        compiler_params=pltpu.CompilerParams(
            dimension_semantics=("arbitrary",),             # reduction axis
            vmem_limit_bytes=32 * 1024 * 1024),
    )(inputs, t)
    return out[0, 0]


def _tversky_loss_ref(inputs, targets, *, alpha=0.7, beta=0.3, smooth=1.0):
    """Pure-JAX reference matching the PyTorch module."""
    p = jax.nn.softmax(inputs.astype(jnp.float32), axis=1)
    one_hot = jax.nn.one_hot(targets, inputs.shape[1], dtype=jnp.float32)
    tp = jnp.sum(p * one_hot, axis=0)
    fp = jnp.sum((1.0 - one_hot) * p, axis=0)
    fn = jnp.sum(one_hot * (1.0 - p), axis=0)
    tversky = (tp + smooth) / (tp + alpha * fp + beta * fn + smooth)
    return 1.0 - jnp.mean(tversky)


if __name__ == "__main__":
    key = jax.random.PRNGKey(0)
    k_x, k_t = jax.random.split(key)

    C = 32

    # Small single-block case (8 samples, 32 classes).
    N = 8
    inputs = jax.random.normal(k_x, (N, C), dtype=jnp.float32)
    targets = jax.random.randint(k_t, (N,), 0, C, dtype=jnp.int32)
    loss = tversky_loss(inputs, targets)
    jax.block_until_ready(loss)
    ref = _tversky_loss_ref(inputs, targets)
    assert jnp.allclose(loss, ref, atol=1e-5, rtol=1e-5), (loss, ref)

    # Single full-extent block with N not a multiple of 8.
    N2 = 50
    inputs2 = jax.random.normal(k_x, (N2, C), dtype=jnp.float32)
    targets2 = jax.random.randint(k_t, (N2,), 0, C, dtype=jnp.int32)
    loss2 = tversky_loss(inputs2, targets2)
    jax.block_until_ready(loss2)
    ref2 = _tversky_loss_ref(inputs2, targets2)
    assert jnp.allclose(loss2, ref2, atol=1e-5, rtol=1e-5), (loss2, ref2)

    # Gridded path with a ragged last block (exercises the in-kernel mask and
    # the multi-step Gram accumulation) by forcing a small tile.
    N3 = 300
    inputs3 = jax.random.normal(k_x, (N3, C), dtype=jnp.float32)
    targets3 = jax.random.randint(k_t, (N3,), 0, C, dtype=jnp.int32)
    loss3 = tversky_loss(inputs3, targets3, max_tile_n=128)
    jax.block_until_ready(loss3)
    ref3 = _tversky_loss_ref(inputs3, targets3)
    assert jnp.allclose(loss3, ref3, atol=1e-5, rtol=1e-5), (loss3, ref3)

    print("KERNEL_OK")
</pallas_src>

<mosaic_0001>
module attributes {stable_mosaic.version = 11 : i64} {
  func.func @_tversky_kernel(%arg0: i32, %arg1: memref<8x32xf32, #tpu.memory_space<vmem>>, %arg2: memref<1x8xi32, #tpu.memory_space<vmem>>, %arg3: memref<1x1xf32, #tpu.memory_space<smem>>, %arg4: memref<32x32xf32, #tpu.memory_space<vmem>>) attributes {dimension_semantics = [#tpu.dimension_semantics<arbitrary>], iteration_bounds = array<i64: 1>, scalar_prefetch = 0 : i64, scratch_operands = 1 : i64, tpu.core_type = #tpu.core_type<tc>, window_params = [{transform_indices = @transform_0, window_bounds = array<i64: 8, 32>}, {transform_indices = @transform_1, window_bounds = array<i64: 1, 8>}, {transform_indices = @transform_2, window_bounds = array<i64: 1, 1>}]} {
    %c0_i32 = arith.constant 0 : i32
    %0 = arith.cmpi eq, %arg0, %c0_i32 : i32
    %1 = arith.extui %0 : i1 to i32
    %c0_i32_0 = arith.constant 0 : i32
    %2 = arith.cmpi ne, %1, %c0_i32_0 : i32
    scf.if %2 {
      %cst_12 = arith.constant 0.000000e+00 : f32
      %27 = vector.broadcast %cst_12 : f32 to vector<32x32xf32>
      %c0_13 = arith.constant 0 : index
      %c0_14 = arith.constant 0 : index
      %28 = vector.load %arg4[%c0_13, %c0_14] : memref<32x32xf32, #tpu.memory_space<vmem>>, vector<32x32xf32>
      tpu.vector_store %arg4[%c0_13, %c0_14], %27 {strides = array<i32>} : memref<32x32xf32, #tpu.memory_space<vmem>>, vector<32x32xf32>,
    } else {
    }
    %c0 = arith.constant 0 : index
    %c0_1 = arith.constant 0 : index
    %3 = vector.load %arg1[%c0, %c0_1] : memref<8x32xf32, #tpu.memory_space<vmem>>, vector<8x32xf32>
    %c0_2 = arith.constant 0 : index
    %c0_3 = arith.constant 0 : index
    %4 = vector.load %arg2[%c0_2, %c0_3] : memref<1x8xi32, #tpu.memory_space<vmem>>, vector<1x8xi32>
    %cst = arith.constant dense<0xFF800000> : vector<8xf32>
    %5 = vector.multi_reduction <maximumf>, %3, %cst [1] : vector<8x32xf32> to vector<8xf32>
    %6 = vector.shape_cast %5 : vector<8xf32> to vector<8x1xf32>
    %7 = vector.broadcast %6 : vector<8x1xf32> to vector<8x32xf32>
    %8 = arith.subf %3, %7 : vector<8x32xf32>
    %9 = math.exp %8 : vector<8x32xf32>
    %cst_4 = arith.constant dense<0.000000e+00> : vector<8xf32>
    %10 = vector.multi_reduction <add>, %9, %cst_4 [1] : vector<8x32xf32> to vector<8xf32>
    %11 = vector.shape_cast %10 : vector<8xf32> to vector<8x1xf32>
    %12 = tpu.reciprocal %11 : vector<8x1xf32> -> vector<8x1xf32>
    %13 = vector.broadcast %12 : vector<8x1xf32> to vector<8x32xf32>
    %14 = arith.mulf %9, %13 : vector<8x32xf32>
    %15 = tpu.iota {dimensions = array<i32: 0>} : vector<32x8xi32>
    %16 = vector.broadcast %4 : vector<1x8xi32> to vector<32x8xi32>
    %17 = arith.cmpi eq, %15, %16 : vector<32x8xi32>
    %18 = arith.extui %17 : vector<32x8xi1> to vector<32x8xi32>
    %19 = arith.sitofp %18 : vector<32x8xi32> to vector<32x8xf32>
    %c0_5 = arith.constant 0 : index
    %c0_6 = arith.constant 0 : index
    %20 = vector.load %arg4[%c0_5, %c0_6] : memref<32x32xf32, #tpu.memory_space<vmem>>, vector<32x32xf32>
    %cst_7 = arith.constant dense<0.000000e+00> : vector<32x32xf32>
    %21 = tpu.matmul %19, %14, %cst_7 {dimension_numbers = #tpu.dot_dimension_numbers<[1], [0], [0], [1], [0, 0, 1, 1], [], []>} : vector<32x8xf32>, vector<8x32xf32>, vector<32x32xf32> -> vector<32x32xf32>
    %22 = arith.addf %20, %21 : vector<32x32xf32>
    %c0_8 = arith.constant 0 : index
    %c0_9 = arith.constant 0 : index
    %23 = vector.load %arg4[%c0_8, %c0_9] : memref<32x32xf32, #tpu.memory_space<vmem>>, vector<32x32xf32>
    tpu.vector_store %arg4[%c0_8, %c0_9], %22 {strides = array<i32>} : memref<32x32xf32, #tpu.memory_space<vmem>>, vector<32x32xf32>,
    %c0_i32_10 = arith.constant 0 : i32
    %24 = arith.cmpi eq, %arg0, %c0_i32_10 : i32
    %25 = arith.extui %24 : i1 to i32
    %c0_i32_11 = arith.constant 0 : i32
    %26 = arith.cmpi ne, %25, %c0_i32_11 : i32
    scf.if %26 {
      %c0_12 = arith.constant 0 : index
      %c0_13 = arith.constant 0 : index
      %27 = vector.load %arg4[%c0_12, %c0_13] : memref<32x32xf32, #tpu.memory_space<vmem>>, vector<32x32xf32>
      %28 = tpu.iota {dimensions = array<i32: 0>} : vector<32x32xi32>
      %29 = tpu.iota {dimensions = array<i32: 1>} : vector<32x32xi32>
      %30 = arith.cmpi eq, %28, %29 : vector<32x32xi32>
      %31 = arith.extui %30 : vector<32x32xi1> to vector<32x32xi32>
      %32 = arith.sitofp %31 : vector<32x32xi32> to vector<32x32xf32>
      %33 = arith.mulf %27, %32 : vector<32x32xf32>
      %cst_14 = arith.constant dense<0.000000e+00> : vector<32xf32>
      %34 = vector.multi_reduction <add>, %33, %cst_14 [0] : vector<32x32xf32> to vector<32xf32>
      %35 = vector.shape_cast %34 : vector<32xf32> to vector<1x32xf32>
      %cst_15 = arith.constant dense<0.000000e+00> : vector<32xf32>
      %36 = vector.multi_reduction <add>, %27, %cst_15 [0] : vector<32x32xf32> to vector<32xf32>
      %37 = vector.shape_cast %36 : vector<32xf32> to vector<1x32xf32>
      %cst_16 = arith.constant dense<0.000000e+00> : vector<32xf32>
      %38 = vector.multi_reduction <add>, %27, %cst_16 [1] : vector<32x32xf32> to vector<32xf32>
      %39 = vector.shape_cast %38 : vector<32xf32> to vector<32x1xf32>
      %40 = vector.broadcast %39 : vector<32x1xf32> to vector<32x32xf32>
      %41 = arith.mulf %32, %40 : vector<32x32xf32>
      %cst_17 = arith.constant dense<0.000000e+00> : vector<32xf32>
      %42 = vector.multi_reduction <add>, %41, %cst_17 [0] : vector<32x32xf32> to vector<32xf32>
      %43 = vector.shape_cast %42 : vector<32xf32> to vector<1x32xf32>
      %44 = arith.subf %37, %35 : vector<1x32xf32>
      %45 = arith.subf %43, %35 : vector<1x32xf32>
      %cst_18 = arith.constant 1.000000e+00 : f32
      %46 = vector.broadcast %cst_18 : f32 to vector<1x32xf32>
      %47 = arith.addf %35, %46 : vector<1x32xf32>
      %cst_19 = arith.constant 0.699999988 : f32
      %48 = vector.broadcast %cst_19 : f32 to vector<1x32xf32>
      %49 = arith.mulf %48, %44 : vector<1x32xf32>
      %50 = arith.addf %35, %49 : vector<1x32xf32>
      %cst_20 = arith.constant 3.000000e-01 : f32
      %51 = vector.broadcast %cst_20 : f32 to vector<1x32xf32>
      %52 = arith.mulf %51, %45 : vector<1x32xf32>
      %53 = arith.addf %50, %52 : vector<1x32xf32>
      %cst_21 = arith.constant 1.000000e+00 : f32
      %54 = vector.broadcast %cst_21 : f32 to vector<1x32xf32>
      %55 = arith.addf %53, %54 : vector<1x32xf32>
      %56 = arith.divf %47, %55 : vector<1x32xf32>
      %57 = vector.shape_cast %56 : vector<1x32xf32> to vector<1x1x32xf32>
      %cst_22 = arith.constant dense<0.000000e+00> : vector<1xf32>
      %58 = vector.multi_reduction <add>, %57, %cst_22 [1, 2] : vector<1x1x32xf32> to vector<1xf32>
      %59 = vector.shape_cast %58 : vector<1xf32> to vector<1x1x1xf32>
      %60 = vector.extract %59[0, 0, 0] : f32 from vector<1x1x1xf32>
      %cst_23 = arith.constant 3.200000e+01 : f32
      %61 = arith.divf %60, %cst_23 : f32
      %cst_24 = arith.constant 1.000000e+00 : f32
      %62 = arith.subf %cst_24, %61 : f32
      %c0_25 = arith.constant 0 : index
      %c0_26 = arith.constant 0 : index
      %63 = memref.load %arg3[%c0_25, %c0_26] : memref<1x1xf32, #tpu.memory_space<smem>>
      memref.store %62, %arg3[%c0_25, %c0_26] : memref<1x1xf32, #tpu.memory_space<smem>>
    } else {
    }
    return
  }
  func.func @transform_0(%arg0: i32) -> (i32, i32) {
    %c0_i32 = arith.constant 0 : i32
    %c0_i32_0 = arith.constant 0 : i32
    return %arg0, %c0_i32 : i32, i32
  }
  func.func @transform_1(%arg0: i32) -> (i32, i32) {
    %c0_i32 = arith.constant 0 : i32
    %c0_i32_0 = arith.constant 0 : i32
    return %c0_i32, %arg0 : i32, i32
  }
  func.func @transform_2(%arg0: i32) -> (i32, i32) {
    %c0_i32 = arith.constant 0 : i32
    %c0_i32_0 = arith.constant 0 : i32
    %c0_i32_1 = arith.constant 0 : i32
    return %c0_i32, %c0_i32_0 : i32, i32
  }
}

</mosaic_0001>

<llo_original>
// kernel: tpu_custom_call.1
$region0: #{tpu_custom_call.1}
  #allocation0 [shape = 'u32[]', space=smem, size = 0x4, offset = 0x4, fixed_abs, tag = 'smem constant byte address 0x4 - core index']
  #allocation1 [shape = 'u32[144,128]{1,0:T(1,128)}', space=vmem, size = 0x12000, scoped, tag = 'internal scratch']
  #allocation2 [shape = 'f32[32,32]{1,0:T(8,128)}', space=vmem, size = 0x4000, scoped, tag = 'scratch operand']
  %s0 = inlined_call_operand.hbm [shape: f32[8,32], index: 0, kind: input, shape index: {}]
  %s1 = inlined_call_operand.vmem [shape: s32[1,8], index: 1, kind: input, shape index: {}]
  %s2 = inlined_call_operand.hbm [shape: f32[1,1], index: 2, kind: output, shape index: {}]
  %s3 = sld [smem:[#allocation0]]
  $region30: #{tpu_custom_call.1} parent=0
    _
  %s5 = ssub.s32 1, %s3
  %s6 = scalar_select 0, %s5, %s3
  $region1: #{tpu_custom_call.1} parent=0
    #allocation3 [shape = 'u8[4096]{0}', space=vmem, size = 0x1000, scoped, tag = 'input window, operand 0, single buffered']
    #allocation4 [shape = 's32[1]{0}', space=sflag, size = 0x4, scoped, tag = 'scoped memory for tpu_custom_call.1']
    #allocation5 [shape = 's32[1]{0}', space=sflag, size = 0x4, scoped, tag = 'scoped memory for tpu_custom_call.1']
    #allocation6 [shape = 'u8[512]{0}', space=smem, size = 0x200, scoped, tag = 'output window, operand 0, single buffered']
    %7 = vsyncpa [#allocation4], 0
    %8 = vsyncpa [#allocation5], 0
    // Predicated region
    $region2: #{tpu_custom_call.1} parent=1 // pred_check
      _
    $region3: #{tpu_custom_call.1} parent=1 // pred_check_branch
      %10 = sbr.rel (0) target = $region5
    $region4: #{tpu_custom_call.1} parent=1 // pred_region
      %s12 = ssub.s32 128, 128
      %13 = vsyncadd [#allocation4], %s12
      %s15 = sshll.u32 [#allocation3], 4
      %s16 = int_to_ptr.vmem [resolvable:$true] %s15
      %18 = dma.hbm_to_vmem [thread:$0]  %s0, 128, %s16, [#allocation4]
    $region5: #{tpu_custom_call.1} parent=1 // pred_fallthru
      _
    // Predicated region
    $region6: #{tpu_custom_call.1} parent=1 // pred_check
      _
    $region7: #{tpu_custom_call.1} parent=1 // pred_check_branch
      %20 = sbr.rel (0) target = $region9
    $region8: #{tpu_custom_call.1} parent=1 // pred_region
      _
    $region9: #{tpu_custom_call.1} parent=1 // pred_fallthru
      _
    // Predicated region
    $region10: #{tpu_custom_call.1} parent=1 // pred_check
      _
    $region11: #{tpu_custom_call.1} parent=1 // pred_check_branch
      %22 = sbr.rel (0) target = $region13
    $region12: #{tpu_custom_call.1} parent=1 // pred_region
      %23 = dma.done [#allocation4], 128
    $region13: #{tpu_custom_call.1} parent=1 // pred_fallthru
      _
    %p24 = scmp.eq.s32.totalorder 0, 0
    // Predicated region
    $region14: #{tpu_custom_call.1} parent=1 // pred_check
      %p25 = pneg %p24
    $region15: #{tpu_custom_call.1} parent=1 // pred_check_branch
      %27 = sbr.rel (%p25) target = $region17
    $region16: #{tpu_custom_call.1} parent=1 // pred_region
      %vm28 = vcmask 261120
      %29 = vst.msk [vmem:[#allocation2] sm:$0xff] %vm28, 0.0
      %30 = vst.msk [vmem:[#allocation2 + $0x8] sm:$0xff] %vm28, 0.0
      %31 = vst.msk [vmem:[#allocation2 + $0x10] sm:$0xff] %vm28, 0.0
      %32 = vst.msk [vmem:[#allocation2 + $0x18] sm:$0xff] %vm28, 0.0
    $region17: #{tpu_custom_call.1} parent=1 // pred_fallthru
      _
    %v33 = vld [vmem:[#allocation3] sm:$0xff]
    %v34 = vld [vmem:[%s1] sm:$0x1]
    %vm35 = vcmask 261120
    %v36 = vsel %vm35, %v33, -inf
    %37 = vmax.xlane.f32.xlu0 %v36
    %v38 = vpop.xlane.xlu0 %37
    %v39 = vsub.f32 %v33, %v38
    %v40 = vmul.f32 %v39, 1.442695
    %v41 = vpow.pop %v40
    %v42 = vsel %vm35, %v41, 0.0
    %43 = vadd.xlane.f32.xlu0 %v42
    %v44 = vpop.xlane.xlu0 %43
    %v45 = vrcp.pop %v44
    %v46 = vmul.f32 %v41, %v45
    %v47 = vlaneseq
    %v48 = vshrl.u32 %v47, 7
    %v49 = vadd.s32 %v48, 8
    %v50 = vadd.s32 %v48, 16
    %v51 = vadd.s32 %v48, 24
    %v52 = vlaneseq
    %v53 = vshrl.u32 %v52, 7
    %v54 = vsub.s32 0, %v53
    %v55 = vrot.slane %v34, %v54
    %vm56 = vcmp.eq.s32.totalorder %v48, %v55
    %vm57 = vcmp.eq.s32.totalorder %v49, %v55
    %vm58 = vcmp.eq.s32.totalorder %v50, %v55
    %vm59 = vcmp.eq.s32.totalorder %v51, %v55
    %v60 = vsel %vm56, 1, 0
    %v61 = vsel %vm57, 1, 0
    %v62 = vsel %vm58, 1, 0
    %v63 = vsel %vm59, 1, 0
    %v64 = vcvt.s32.f32 %v60
    %v65 = vcvt.s32.f32 %v61
    %v66 = vcvt.s32.f32 %v62
    %v67 = vcvt.s32.f32 %v63
    %v68 = vld [vmem:[#allocation2] sm:$0xff]
    %v69 = vld [vmem:[#allocation2 + $0x8] sm:$0xff]
    %v70 = vld [vmem:[#allocation2 + $0x10] sm:$0xff]
    %v71 = vld [vmem:[#allocation2 + $0x18] sm:$0xff]
    %vm72 = vcmask 64512
    %v74 = vsel %vm72, %v64, 0
    %v77 = vsel %vm72, %v65, 0
    %v80 = vsel %vm72, %v66, 0
    %v83 = vsel %vm72, %v67, 0
    %85 = vmatprep.subr.mxu0 0.0
    %86 = vmatpush1.msra.mxu0 %v46
    %87 = vmatprep.subr.mxu0 0.0
    %88 = vmatpush1.msra.mxu0 0.0
    %89 = vmatprep.subr.mxu0 0.0
    %90 = vmatpush1.msra.mxu0 0.0
    %91 = vmatprep.subr.mxu0 0.0
    %92 = vmatpush1.msra.mxu0 0.0
    %93 = vmatprep.subr.mxu0 0.0
    %94 = vmatpush1.msra.mxu0 0.0
    %95 = vmatprep.subr.mxu0 0.0
    %96 = vmatpush1.msra.mxu0 0.0
    %97 = vmatprep.subr.mxu0 0.0
    %98 = vmatpush1.msra.mxu0 0.0
    %99 = vmatprep.subr.mxu0 0.0
    %100 = vmatpush1.msra.mxu0 0.0
    %101 = vmatprep.subr.mxu0 0.0
    %102 = vmatpush1.msra.mxu0 0.0
    %103 = vmatprep.subr.mxu0 0.0
    %104 = vmatpush1.msra.mxu0 0.0
    %105 = vmatprep.subr.mxu0 0.0
    %106 = vmatpush1.msra.mxu0 0.0
    %107 = vmatprep.subr.mxu0 0.0
    %108 = vmatpush1.msra.mxu0 0.0
    %109 = vmatprep.subr.mxu0 0.0
    %110 = vmatpush1.msra.mxu0 0.0
    %111 = vmatprep.subr.mxu0 0.0
    %112 = vmatpush1.msra.mxu0 0.0
    %113 = vmatprep.subr.mxu0 0.0
    %114 = vmatpush1.msra.mxu0 0.0
    %115 = vmatprep.subr.mxu0 0.0
    %116 = vmatpush1.msra.mxu0 0.0
    %117 = vmatprep.subr.mxu0 0.0
    %118 = vmatpush1.msra.mxu0 0.0
    %119 = vmatprep.subr.mxu0 0.0
    %120 = vmatpush1.msra.mxu0 0.0
    %121 = vmatprep.subr.mxu0 0.0
    %122 = vmatpush1.msra.mxu0 0.0
    %123 = vmatprep.subr.mxu0 0.0
    %124 = vmatpush1.msra.mxu0 0.0
    %125 = vmatprep.subr.mxu0 0.0
    %126 = vmatpush1.msra.mxu0 0.0
    %127 = vmatprep.subr.mxu0 0.0
    %128 = vmatpush1.msra.mxu0 0.0
    %129 = vmatprep.subr.mxu0 0.0
    %130 = vmatpush1.msra.mxu0 0.0
    %131 = vmatprep.subr.mxu0 0.0
    %132 = vmatpush1.msra.mxu0 0.0
    %133 = vmatprep.subr.mxu0 0.0
    %134 = vmatpush1.msra.mxu0 0.0
    %135 = vmatprep.subr.mxu0 0.0
    %136 = vmatpush1.msra.mxu0 0.0
    %137 = vmatprep.subr.mxu0 0.0
    %138 = vmatpush1.msra.mxu0 0.0
    %139 = vmatprep.subr.mxu0 0.0
    %140 = vmatpush1.msra.mxu0 0.0
    %141 = vmatprep.subr.mxu0 0.0
    %142 = vmatpush1.msra.mxu0 0.0
    %143 = vmatprep.subr.mxu0 0.0
    %144 = vmatpush1.msra.mxu0 0.0
    %145 = vmatprep.subr.mxu0 0.0
    %146 = vmatpush1.msra.mxu0 0.0
    %147 = vmatprep.subr.mxu0 0.0
    %148 = vmatpush1.msra.mxu0 0.0
    %149 = vmatprep.mubr.f32.mxu0 0.0
    %150 = vmatmul.mubr.f32.gmra.mrb[0].mxu0 %v74
    %v151 = vpop.f32.mrb[0].mxu0
    %v152 = vadd.f32 0.0, %v151
    %v153 = vpop.f32.mrb[0].mxu0
    %154 = vmatprep.mubr.f32.mxu0 0.0
    %155 = vmatmul.mubr.f32.gmra.mrb[0].mxu0 %v77
    %v156 = vpop.f32.mrb[0].mxu0
    %v157 = vadd.f32 0.0, %v156
    %v158 = vpop.f32.mrb[0].mxu0
    %159 = vmatprep.mubr.f32.mxu0 0.0
    %160 = vmatmul.mubr.f32.gmra.mrb[0].mxu0 %v80
    %v161 = vpop.f32.mrb[0].mxu0
    %v162 = vadd.f32 0.0, %v161
    %v163 = vpop.f32.mrb[0].mxu0
    %164 = vmatprep.mubr.f32.mxu0 0.0
    %165 = vmatmul.mubr.f32.gmra.mrb[0].mxu0 %v83
    %v166 = vpop.f32.mrb[0].mxu0
    %v167 = vadd.f32 0.0, %v166
    %v168 = vpop.f32.mrb[0].mxu0
    %169 = vdwg.mxu0
    %v170 = vadd.f32 %v68, %v152
    %v171 = vadd.f32 %v69, %v157
    %v172 = vadd.f32 %v70, %v162
    %v173 = vadd.f32 %v71, %v167
    %174 = vst.msk [vmem:[#allocation2] sm:$0xff] %vm35, %v170
    %175 = vst.msk [vmem:[#allocation2 + $0x8] sm:$0xff] %vm35, %v171
    %176 = vst.msk [vmem:[#allocation2 + $0x10] sm:$0xff] %vm35, %v172
    %177 = vst.msk [vmem:[#allocation2 + $0x18] sm:$0xff] %vm35, %v173
    // Predicated region
    $region18: #{tpu_custom_call.1} parent=1 // pred_check
      %p178 = pneg %p24
    $region19: #{tpu_custom_call.1} parent=1 // pred_check_branch
      %180 = sbr.rel (%p178) target = $region21
    $region20: #{tpu_custom_call.1} parent=1 // pred_region
      %v181 = vld [vmem:[#allocation2] sm:$0xff]
      %v182 = vld [vmem:[#allocation2 + $0x8] sm:$0xff]
      %v183 = vld [vmem:[#allocation2 + $0x10] sm:$0xff]
      %v184 = vld [vmem:[#allocation2 + $0x18] sm:$0xff]
      %v185 = vlaneseq
      %v186 = vand.u32 %v185, 127
      %vm187 = vcmp.eq.s32.totalorder %v48, %v186
      %vm188 = vcmp.eq.s32.totalorder %v49, %v186
      %vm189 = vcmp.eq.s32.totalorder %v50, %v186
      %vm190 = vcmp.eq.s32.totalorder %v51, %v186
      %v191 = vsel %vm187, 1, 0
      %v192 = vsel %vm188, 1, 0
      %v193 = vsel %vm189, 1, 0
      %v194 = vsel %vm190, 1, 0
      %v195 = vcvt.s32.f32 %v191
      %v196 = vcvt.s32.f32 %v192
      %v197 = vcvt.s32.f32 %v193
      %v198 = vcvt.s32.f32 %v194
      %v199 = vmul.f32 %v181, %v195
      %v200 = vmul.f32 %v182, %v196
      %v201 = vmul.f32 %v183, %v197
      %v202 = vmul.f32 %v184, %v198
      %v203 = vsel %vm35, %v199, 0.0
      %v204 = vsel %vm35, %v200, 0.0
      %v205 = vadd.f32 %v203, %v204
      %v206 = vsel %vm35, %v201, 0.0
      %v207 = vadd.f32 %v205, %v206
      %v208 = vsel %vm35, %v202, 0.0
      %v209 = vadd.f32 %v207, %v208
      %v210 = vrot.slane %v209, 4
      %v211 = vadd.f32 %v209, %v210
      %v212 = vrot.slane %v211, 2
      %v213 = vadd.f32 %v211, %v212
      %v214 = vrot.slane %v213, 1
      %v215 = vadd.f32 %v213, %v214
      %v216 = vsel %vm35, %v181, 0.0
      %v217 = vsel %vm35, %v182, 0.0
      %v218 = vadd.f32 %v216, %v217
      %v219 = vsel %vm35, %v183, 0.0
      %v220 = vadd.f32 %v218, %v219
      %v221 = vsel %vm35, %v184, 0.0
      %v222 = vadd.f32 %v220, %v221
      %v223 = vrot.slane %v222, 4
      %v224 = vadd.f32 %v222, %v223
      %v225 = vrot.slane %v224, 2
      %v226 = vadd.f32 %v224, %v225
      %v227 = vrot.slane %v226, 1
      %v228 = vadd.f32 %v226, %v227
      %229 = vadd.xlane.f32.xlu0 %v216
      %v230 = vpop.xlane.xlu0 %229
      %231 = vadd.xlane.f32.xlu0 %v217
      %v232 = vpop.xlane.xlu0 %231
      %233 = vadd.xlane.f32.xlu0 %v219
      %v234 = vpop.xlane.xlu0 %233
      %235 = vadd.xlane.f32.xlu0 %v221
      %v236 = vpop.xlane.xlu0 %235
      %v237 = vmul.f32 %v195, %v230
      %v238 = vmul.f32 %v196, %v232
      %v239 = vmul.f32 %v197, %v234
      %v240 = vmul.f32 %v198, %v236
      %v241 = vsel %vm35, %v237, 0.0
      %v242 = vsel %vm35, %v238, 0.0
      %v243 = vadd.f32 %v241, %v242
      %v244 = vsel %vm35, %v239, 0.0
      %v245 = vadd.f32 %v243, %v244
      %v246 = vsel %vm35, %v240, 0.0
      %v247 = vadd.f32 %v245, %v246
      %v248 = vrot.slane %v247, 4
      %v249 = vadd.f32 %v247, %v248
      %v250 = vrot.slane %v249, 2
      %v251 = vadd.f32 %v249, %v250
      %v252 = vrot.slane %v251, 1
      %v253 = vadd.f32 %v251, %v252
      %v254 = vsub.f32 %v228, %v215
      %v255 = vsub.f32 %v253, %v215
      %v256 = vadd.f32 %v215, 1.0
      %v257 = vmul.f32 %v254, 0.7
      %v258 = vadd.f32 %v215, %v257
      %v259 = vmul.f32 %v255, 0.3
      %v260 = vadd.f32 %v258, %v259
      %v261 = vadd.f32 %v260, 1.0
      %v262 = vrcp.pop %v261
      %v263 = vmul.f32 %v256, %v262
      %vm264 = vcmask 253952
      %v265 = vsel %vm264, %v263, 0.0
      %266 = vadd.xlane.f32.xlu0 %v265
      %v267 = vpop.xlane.xlu0 %266
      %v268 = vrot.slane %v267, 4
      %v269 = vadd.f32 %v267, %v268
      %v270 = vrot.slane %v269, 2
      %v271 = vadd.f32 %v269, %v270
      %v272 = vrot.slane %v271, 1
      %v273 = vadd.f32 %v271, %v272
      %s274 = vtos %v273
      %v275 = vrcp.pop 32.0
      %s276 = vtos %v275
      %s277 = smul.f32 %s274, %s276
      %s278 = ssub.f32 1.0, %s277
      %s279 = scalar_lea.smem [#allocation6], 0
      %280 = sst [smem:[%s279]] %s278
    $region21: #{tpu_custom_call.1} parent=1 // pred_fallthru
      _
    // Predicated region
    $region22: #{tpu_custom_call.1} parent=1 // pred_check
      _
    $region23: #{tpu_custom_call.1} parent=1 // pred_check_branch
      %282 = sbr.rel (0) target = $region25
    $region24: #{tpu_custom_call.1} parent=1 // pred_region
      %s284 = ssub.s32 16, 16
      %285 = vsyncadd [#allocation5], %s284
      %288 = dma.smem_to_hbm [#allocation6], 16, %s2, [#allocation5]
    $region25: #{tpu_custom_call.1} parent=1 // pred_fallthru
      _
    // Predicated region
    $region26: #{tpu_custom_call.1} parent=1 // pred_check
      _
    $region27: #{tpu_custom_call.1} parent=1 // pred_check_branch
      %290 = sbr.rel (0) target = $region29
    $region28: #{tpu_custom_call.1} parent=1 // pred_region
      %291 = dma.done [#allocation5], 16
    $region29: #{tpu_custom_call.1} parent=1 // pred_fallthru
      _
    %292 = sfence
    %293 = vsyncpa [#allocation4], 1
    %294 = vsyncpa [#allocation5], 1

</llo_original>
